<compile_context>
chip_gen: v5e
topology: v5e:2x2
jax: 0.10.0
libtpu: 0.0.40
codegen_flags: <defaults>
</compile_context>

<pallas_src>
import functools

import jax
import jax.numpy as jnp
from jax.experimental import pallas as pl
from jax.experimental.pallas import tpu as pltpu

_LN_EPS = 1e-5


def _round_up(x, m):
    return ((x + m - 1) // m) * m


# ---------------------------------------------------------------------------
# Kernel
# ---------------------------------------------------------------------------
def _linear_norm_act(x, w, b, g, beta, n_true, act):
    """bf16 Linear (f32 accumulate) -> LayerNorm over first n_true lanes -> act.

    Padded lanes (>= n_true) of w / b / g / beta are exactly zero, so they
    contribute 0 to the fused sum / sum-of-squares statistics (divided by the
    TRUE feature count), and the normalized output stays exactly 0 there
    (gamma == beta == 0 in the pad). That keeps the zero-pad invariant through
    every layer."""
    y = jnp.dot(x, w, preferred_element_type=jnp.float32) + b
    inv_n = jnp.float32(1.0 / n_true)
    s = jnp.sum(y, axis=-1, keepdims=True)
    s2 = jnp.sum(y * y, axis=-1, keepdims=True)
    mean = s * inv_n
    var = jnp.maximum(s2 * inv_n - mean * mean, 0.0)   # clamp f32 cancellation
    y = (y - mean) * jax.lax.rsqrt(var + _LN_EPS) * g + beta
    return act(y)


def actor_kernel(obs_ref,                              # (Bt, repr_dim) f32
                 w0_ref, w1_ref, w2_ref, wh_ref,       # bf16 weights (padded)
                 vtr_ref,                              # (3, FP) f32: b0,g0,be0
                 vpo_ref,                              # (6, HP) f32: b1,g1,be1,b2,g2,be2
                 bh_ref,                               # (1, AP) f32
                 mu_ref,
                 *, feature_dim, hidden_dim):
    relu = lambda v: jnp.maximum(v, 0.0)

    # f32 HBM read; bf16 cast happens in-register right before the MXU.
    x = obs_ref[...].astype(jnp.bfloat16)

    h = _linear_norm_act(x, w0_ref[...],
                         vtr_ref[0:1, :], vtr_ref[1:2, :], vtr_ref[2:3, :],
                         feature_dim, jnp.tanh)
    h = _linear_norm_act(h.astype(jnp.bfloat16), w1_ref[...],
                         vpo_ref[0:1, :], vpo_ref[1:2, :], vpo_ref[2:3, :],
                         hidden_dim, relu)
    h = _linear_norm_act(h.astype(jnp.bfloat16), w2_ref[...],
                         vpo_ref[3:4, :], vpo_ref[4:5, :], vpo_ref[5:6, :],
                         hidden_dim, relu)

    mu = jnp.tanh(jnp.dot(h.astype(jnp.bfloat16), wh_ref[...],
                          preferred_element_type=jnp.float32) + bh_ref[...])
    mu_ref[...] = mu.astype(mu_ref.dtype)              # lane-dense (Bt, AP) store


# ---------------------------------------------------------------------------
# Parameter preparation (done once, NOT per forward call)
# ---------------------------------------------------------------------------
def prepare_params(params):
    """Zero-pad features to 128 lanes and cast weights to bf16, once.

    jnp.pad zero-fills; the kernel's LayerNorm correctness relies on the pads
    staying exactly zero, so never rescale these arrays in place."""
    repr_dim, feature_dim = params["w0"].shape
    hidden_dim = params["w1"].shape[1]
    action_dim = params["wh"].shape[1]
    FP = _round_up(feature_dim, 128)
    HP = _round_up(hidden_dim, 128)
    AP = _round_up(action_dim, 128)

    def padv(a, cols):
        a = a.reshape(1, -1)
        return jnp.pad(a, ((0, 0), (0, cols - a.shape[1]))).astype(jnp.float32)

    def padw(a, rows, cols):
        return jnp.pad(a, ((0, rows - a.shape[0]),
                           (0, cols - a.shape[1]))).astype(jnp.bfloat16)

    return dict(
        repr_dim=repr_dim, feature_dim=feature_dim,
        hidden_dim=hidden_dim, action_dim=action_dim,
        FP=FP, HP=HP, AP=AP,
        w0=padw(params["w0"], repr_dim, FP),     # K left unpadded (matches obs)
        w1=padw(params["w1"], FP, HP),
        w2=padw(params["w2"], HP, HP),
        wh=padw(params["wh"], HP, AP),
        vec_trunk=jnp.concatenate(
            [padv(params["b0"], FP), padv(params["g0"], FP),
             padv(params["be0"], FP)], axis=0),                      # (3, FP)
        vec_policy=jnp.concatenate(
            [padv(params["b1"], HP), padv(params["g1"], HP), padv(params["be1"], HP),
             padv(params["b2"], HP), padv(params["g2"], HP), padv(params["be2"], HP)],
            axis=0),                                                 # (6, HP)
        bh=padv(params["bh"], AP),                                   # (1, AP)
    )


# ---------------------------------------------------------------------------
# Tiling / VMEM sizing
# ---------------------------------------------------------------------------
def _choose_batch_tile(B, repr_dim, FP, HP, AP, vmem_budget_bytes, max_block_b):
    # The default pipeline allocates 2 VMEM buffers per input, even for
    # constant index_maps (only one DMA is actually issued for those).
    weight_bytes = 2 * 2 * (repr_dim * FP + FP * HP + HP * HP + HP * AP)  # bf16
    vec_bytes = 2 * 4 * (3 * FP + 6 * HP + AP)
    fixed = weight_bytes + vec_bytes
    # Per batch-row: f32 obs tile + f32 mu tile (both double-buffered) plus a
    # rough allowance for the in-body f32/bf16 intermediates.
    per_row = 2 * 4 * repr_dim + 2 * 4 * AP + 6 * (FP + 2 * HP + AP)
    avail = vmem_budget_bytes - fixed
    # TODO(synk): if `fixed` alone exceeds the budget (very large repr/hidden
    # dims on v7x), a K-reduction grid axis over the trunk matmul is needed.
    if avail < 8 * per_row:
        bt = 8
    else:
        bt = max(8, min(max_block_b, (avail // per_row) // 8 * 8))
    if B >= 16:
        # Keep >= 2 grid steps so the "parallel" axis can feed both v7x TCs.
        bt = min(bt, max(8, _round_up(pl.cdiv(B, 2), 8)))
    bt = min(bt, _round_up(B, 8))
    total = fixed + per_row * bt
    vmem_limit = max(32 << 20, int(total) + (8 << 20))
    return bt, vmem_limit


# ---------------------------------------------------------------------------
# Forward wrapper
# ---------------------------------------------------------------------------
def actor_forward(obs_nchw, std_scalar, pp, *,
                  vmem_budget_bytes=40 << 20, max_block_b=256):
    """obs_nchw: (B, C, H, W) float32; std_scalar: scalar; pp: prepare_params(...).
    Returns (mu, std), each (B, action_dim) float32."""
    B = obs_nchw.shape[0]
    obs_flat = obs_nchw.reshape(B, -1)                 # ViewFlatten (row-major)
    repr_dim = pp["repr_dim"]
    assert obs_flat.shape[1] == repr_dim
    FP, HP, AP = pp["FP"], pp["HP"], pp["AP"]
    feature_dim, hidden_dim = pp["feature_dim"], pp["hidden_dim"]
    action_dim = pp["action_dim"]

    Bt, vmem_limit = _choose_batch_tile(B, repr_dim, FP, HP, AP,
                                        vmem_budget_bytes, max_block_b)
    Bp = _round_up(B, Bt)
    if Bp != B:                                        # only pads the batch axis
        obs_flat = jnp.pad(obs_flat, ((0, Bp - B), (0, 0)))

    def const_spec(shape):
        # Constant index_map -> weight stays VMEM-resident across grid steps.
        return pl.BlockSpec(shape, lambda i: (0, 0))

    in_specs = [
        pl.BlockSpec((Bt, repr_dim), lambda i: (i, 0)),   # obs: batch-tiled, K full
        const_spec(pp["w0"].shape),
        const_spec(pp["w1"].shape),
        const_spec(pp["w2"].shape),
        const_spec(pp["wh"].shape),
        const_spec(pp["vec_trunk"].shape),
        const_spec(pp["vec_policy"].shape),
        const_spec(pp["bh"].shape),
    ]

    kernel = functools.partial(actor_kernel,
                               feature_dim=feature_dim, hidden_dim=hidden_dim)

    mu_padded = pl.pallas_call(
        kernel,
        out_shape=jax.ShapeDtypeStruct((Bp, AP), jnp.float32),
        grid=(Bp // Bt,),
        in_specs=in_specs,
        out_specs=pl.BlockSpec((Bt, AP), lambda i: (i, 0)),
        compiler_params=pltpu.CompilerParams(
            dimension_semantics=("parallel",),
            vmem_limit_bytes=vmem_limit,
        ),
    )(obs_flat,
      pp["w0"], pp["w1"], pp["w2"], pp["wh"],
      pp["vec_trunk"], pp["vec_policy"], pp["bh"])

    mu = mu_padded[:B, :action_dim]
    # std is a pure scalar broadcast -> no reason to burn a kernel output DMA.
    std = jnp.full((B, action_dim), jnp.float32(std_scalar))
    return mu, std


# ---------------------------------------------------------------------------
# Pure-JAX reference + synthetic init
# ---------------------------------------------------------------------------
def actor_reference(obs_nchw, std_scalar, params):
    """Pure-JAX reference (f32 everywhere) matching the PyTorch module."""
    B = obs_nchw.shape[0]
    x = obs_nchw.reshape(B, -1)

    def lna(x, w, b, g, be, act):
        y = x @ w + b
        mean = jnp.mean(y, axis=-1, keepdims=True)
        var = jnp.mean((y - mean) ** 2, axis=-1, keepdims=True)
        return act((y - mean) * jax.lax.rsqrt(var + _LN_EPS) * g + be)

    relu = lambda v: jnp.maximum(v, 0.0)
    h = lna(x, params["w0"], params["b0"], params["g0"], params["be0"], jnp.tanh)
    h = lna(h, params["w1"], params["b1"], params["g1"], params["be1"], relu)
    h = lna(h, params["w2"], params["b2"], params["g2"], params["be2"], relu)
    mu = jnp.tanh(h @ params["wh"] + params["bh"])
    return mu, jnp.full_like(mu, std_scalar)


def init_params(key, repr_dim, feature_dim, hidden_dim, action_dim):
    """Deterministic synthetic init (stands in for utils.rl.weight_init_rl)."""
    ks = jax.random.split(key, 4)

    def lin(k, fan_in, fan_out):
        scale = 1.0 / jnp.sqrt(jnp.float32(fan_in))
        w = jax.random.normal(k, (fan_in, fan_out), jnp.float32) * scale
        b = jnp.zeros((1, fan_out), jnp.float32)
        return w, b

    def ln(fan_out):
        return (jnp.ones((1, fan_out), jnp.float32),
                jnp.zeros((1, fan_out), jnp.float32))

    w0, b0 = lin(ks[0], repr_dim, feature_dim);   g0, be0 = ln(feature_dim)
    w1, b1 = lin(ks[1], feature_dim, hidden_dim); g1, be1 = ln(hidden_dim)
    w2, b2 = lin(ks[2], hidden_dim, hidden_dim);  g2, be2 = ln(hidden_dim)
    wh, bh = lin(ks[3], hidden_dim, action_dim)
    return dict(w0=w0, b0=b0, g0=g0, be0=be0,
                w1=w1, b1=b1, g1=g1, be1=be1,
                w2=w2, b2=b2, g2=g2, be2=be2,
                wh=wh, bh=bh)


if __name__ == "__main__":
    # Small shapes consistent with the module: obs (B, C, H, W) -> repr_dim = C*H*W.
    B, C, H, W = 2, 4, 16, 16
    repr_dim = C * H * W            # 1024
    feature_dim = 32
    hidden_dim = 32
    action_dim = 4
    std = 0.2

    key = jax.random.PRNGKey(0)
    k_obs, k_par = jax.random.split(key)
    obs = jax.random.normal(k_obs, (B, C, H, W), jnp.float32)
    params = init_params(k_par, repr_dim, feature_dim, hidden_dim, action_dim)

    # Pad/cast weights ONCE (hoisted out of the per-call forward path).
    pp = prepare_params(params)

    # TODO(synk): utils.rl.TruncatedNormal distribution object has no Pallas
    # equivalent; the kernel returns the (mu, std) that parameterize it.
    mu, std_out = actor_forward(obs, std, pp)
    jax.block_until_ready((mu, std_out))

    mu_ref, std_ref = actor_reference(obs, std, params)

    assert mu.shape == (B, action_dim) and std_out.shape == (B, action_dim)
    assert bool(jnp.all(jnp.abs(mu) <= 1.0))
    assert bool(jnp.allclose(std_out, std_ref))
    # bf16 matmuls (f32 accumulate + LayerNorm renorm) -> loose tolerance vs f32.
    assert bool(jnp.allclose(mu, mu_ref, atol=6e-2, rtol=0.0)), \
        f"max err {float(jnp.max(jnp.abs(mu - mu_ref)))}"
    print("KERNEL_OK")
</pallas_src>

<mosaic_0001>
module attributes {stable_mosaic.version = 11 : i64} {
  func.func @actor_kernel(%arg0: i32, %arg1: memref<8x1024xf32, #tpu.memory_space<vmem>>, %arg2: memref<1024x128xbf16, #tpu.memory_space<vmem>>, %arg3: memref<128x128xbf16, #tpu.memory_space<vmem>>, %arg4: memref<128x128xbf16, #tpu.memory_space<vmem>>, %arg5: memref<128x128xbf16, #tpu.memory_space<vmem>>, %arg6: memref<3x128xf32, #tpu.memory_space<vmem>>, %arg7: memref<6x128xf32, #tpu.memory_space<vmem>>, %arg8: memref<1x128xf32, #tpu.memory_space<vmem>>, %arg9: memref<8x128xf32, #tpu.memory_space<vmem>>) attributes {dimension_semantics = [#tpu.dimension_semantics<parallel>], iteration_bounds = array<i64: 1>, scalar_prefetch = 0 : i64, scratch_operands = 0 : i64, tpu.core_type = #tpu.core_type<tc>, window_params = [{transform_indices = @transform_0, window_bounds = array<i64: 8, 1024>}, {pipeline_mode = #tpu.pipeline_mode<synchronous>, transform_indices = @transform_1, window_bounds = array<i64: 1024, 128>}, {pipeline_mode = #tpu.pipeline_mode<synchronous>, transform_indices = @transform_2, window_bounds = array<i64: 128, 128>}, {pipeline_mode = #tpu.pipeline_mode<synchronous>, transform_indices = @transform_3, window_bounds = array<i64: 128, 128>}, {pipeline_mode = #tpu.pipeline_mode<synchronous>, transform_indices = @transform_4, window_bounds = array<i64: 128, 128>}, {pipeline_mode = #tpu.pipeline_mode<synchronous>, transform_indices = @transform_5, window_bounds = array<i64: 3, 128>}, {pipeline_mode = #tpu.pipeline_mode<synchronous>, transform_indices = @transform_6, window_bounds = array<i64: 6, 128>}, {pipeline_mode = #tpu.pipeline_mode<synchronous>, transform_indices = @transform_7, window_bounds = array<i64: 1, 128>}, {transform_indices = @transform_8, window_bounds = array<i64: 8, 128>}]} {
    %c0 = arith.constant 0 : index
    %c0_0 = arith.constant 0 : index
    %0 = vector.load %arg1[%c0, %c0_0] : memref<8x1024xf32, #tpu.memory_space<vmem>>, vector<8x1024xf32>
    %1 = arith.truncf %0 : vector<8x1024xf32> to vector<8x1024xbf16>
    %c0_1 = arith.constant 0 : index
    %c0_2 = arith.constant 0 : index
    %2 = vector.load %arg2[%c0_1, %c0_2] : memref<1024x128xbf16, #tpu.memory_space<vmem>>, vector<1024x128xbf16>
    %c0_3 = arith.constant 0 : index
    %c0_4 = arith.constant 0 : index
    %3 = vector.load %arg6[%c0_3, %c0_4] : memref<3x128xf32, #tpu.memory_space<vmem>>, vector<1x128xf32>
    %c1 = arith.constant 1 : index
    %c0_5 = arith.constant 0 : index
    %4 = vector.load %arg6[%c1, %c0_5] : memref<3x128xf32, #tpu.memory_space<vmem>>, vector<1x128xf32>
    %c2 = arith.constant 2 : index
    %c0_6 = arith.constant 0 : index
    %5 = vector.load %arg6[%c2, %c0_6] : memref<3x128xf32, #tpu.memory_space<vmem>>, vector<1x128xf32>
    %cst = arith.constant dense<0.000000e+00> : vector<8x128xf32>
    %6 = tpu.matmul %1, %2, %cst {dimension_numbers = #tpu.dot_dimension_numbers<[1], [0], [0], [1], [0, 0, 1, 1], [], []>} : vector<8x1024xbf16>, vector<1024x128xbf16>, vector<8x128xf32> -> vector<8x128xf32>
    %7 = vector.broadcast %3 : vector<1x128xf32> to vector<8x128xf32>
    %8 = arith.addf %6, %7 : vector<8x128xf32>
    %cst_7 = arith.constant dense<0.000000e+00> : vector<8xf32>
    %9 = vector.multi_reduction <add>, %8, %cst_7 [1] : vector<8x128xf32> to vector<8xf32>
    %10 = vector.shape_cast %9 : vector<8xf32> to vector<8x1xf32>
    %11 = arith.mulf %8, %8 : vector<8x128xf32>
    %cst_8 = arith.constant dense<0.000000e+00> : vector<8xf32>
    %12 = vector.multi_reduction <add>, %11, %cst_8 [1] : vector<8x128xf32> to vector<8xf32>
    %13 = vector.shape_cast %12 : vector<8xf32> to vector<8x1xf32>
    %cst_9 = arith.constant 3.125000e-02 : f32
    %14 = vector.broadcast %cst_9 : f32 to vector<8x1xf32>
    %15 = arith.mulf %10, %14 : vector<8x1xf32>
    %cst_10 = arith.constant 3.125000e-02 : f32
    %16 = vector.broadcast %cst_10 : f32 to vector<8x1xf32>
    %17 = arith.mulf %13, %16 : vector<8x1xf32>
    %18 = arith.mulf %15, %15 : vector<8x1xf32>
    %19 = arith.subf %17, %18 : vector<8x1xf32>
    %cst_11 = arith.constant 0.000000e+00 : f32
    %20 = vector.broadcast %cst_11 : f32 to vector<8x1xf32>
    %21 = arith.maximumf %19, %20 : vector<8x1xf32>
    %22 = vector.broadcast %15 : vector<8x1xf32> to vector<8x128xf32>
    %23 = arith.subf %8, %22 : vector<8x128xf32>
    %cst_12 = arith.constant 9.99999974E-6 : f32
    %24 = vector.broadcast %cst_12 : f32 to vector<8x1xf32>
    %25 = arith.addf %21, %24 : vector<8x1xf32>
    %26 = math.rsqrt %25 : vector<8x1xf32>
    %27 = vector.broadcast %26 : vector<8x1xf32> to vector<8x128xf32>
    %28 = arith.mulf %23, %27 : vector<8x128xf32>
    %29 = vector.broadcast %4 : vector<1x128xf32> to vector<8x128xf32>
    %30 = arith.mulf %28, %29 : vector<8x128xf32>
    %31 = vector.broadcast %5 : vector<1x128xf32> to vector<8x128xf32>
    %32 = arith.addf %30, %31 : vector<8x128xf32>
    %33 = math.tanh %32 : vector<8x128xf32>
    %34 = arith.truncf %33 : vector<8x128xf32> to vector<8x128xbf16>
    %c0_13 = arith.constant 0 : index
    %c0_14 = arith.constant 0 : index
    %35 = vector.load %arg3[%c0_13, %c0_14] : memref<128x128xbf16, #tpu.memory_space<vmem>>, vector<128x128xbf16>
    %c0_15 = arith.constant 0 : index
    %c0_16 = arith.constant 0 : index
    %36 = vector.load %arg7[%c0_15, %c0_16] : memref<6x128xf32, #tpu.memory_space<vmem>>, vector<1x128xf32>
    %c1_17 = arith.constant 1 : index
    %c0_18 = arith.constant 0 : index
    %37 = vector.load %arg7[%c1_17, %c0_18] : memref<6x128xf32, #tpu.memory_space<vmem>>, vector<1x128xf32>
    %c2_19 = arith.constant 2 : index
    %c0_20 = arith.constant 0 : index
    %38 = vector.load %arg7[%c2_19, %c0_20] : memref<6x128xf32, #tpu.memory_space<vmem>>, vector<1x128xf32>
    %cst_21 = arith.constant dense<0.000000e+00> : vector<8x128xf32>
    %39 = tpu.matmul %34, %35, %cst_21 {dimension_numbers = #tpu.dot_dimension_numbers<[1], [0], [0], [1], [0, 0, 1, 1], [], []>} : vector<8x128xbf16>, vector<128x128xbf16>, vector<8x128xf32> -> vector<8x128xf32>
    %40 = vector.broadcast %36 : vector<1x128xf32> to vector<8x128xf32>
    %41 = arith.addf %39, %40 : vector<8x128xf32>
    %cst_22 = arith.constant dense<0.000000e+00> : vector<8xf32>
    %42 = vector.multi_reduction <add>, %41, %cst_22 [1] : vector<8x128xf32> to vector<8xf32>
    %43 = vector.shape_cast %42 : vector<8xf32> to vector<8x1xf32>
    %44 = arith.mulf %41, %41 : vector<8x128xf32>
    %cst_23 = arith.constant dense<0.000000e+00> : vector<8xf32>
    %45 = vector.multi_reduction <add>, %44, %cst_23 [1] : vector<8x128xf32> to vector<8xf32>
    %46 = vector.shape_cast %45 : vector<8xf32> to vector<8x1xf32>
    %cst_24 = arith.constant 3.125000e-02 : f32
    %47 = vector.broadcast %cst_24 : f32 to vector<8x1xf32>
    %48 = arith.mulf %43, %47 : vector<8x1xf32>
    %cst_25 = arith.constant 3.125000e-02 : f32
    %49 = vector.broadcast %cst_25 : f32 to vector<8x1xf32>
    %50 = arith.mulf %46, %49 : vector<8x1xf32>
    %51 = arith.mulf %48, %48 : vector<8x1xf32>
    %52 = arith.subf %50, %51 : vector<8x1xf32>
    %cst_26 = arith.constant 0.000000e+00 : f32
    %53 = vector.broadcast %cst_26 : f32 to vector<8x1xf32>
    %54 = arith.maximumf %52, %53 : vector<8x1xf32>
    %55 = vector.broadcast %48 : vector<8x1xf32> to vector<8x128xf32>
    %56 = arith.subf %41, %55 : vector<8x128xf32>
    %cst_27 = arith.constant 9.99999974E-6 : f32
    %57 = vector.broadcast %cst_27 : f32 to vector<8x1xf32>
    %58 = arith.addf %54, %57 : vector<8x1xf32>
    %59 = math.rsqrt %58 : vector<8x1xf32>
    %60 = vector.broadcast %59 : vector<8x1xf32> to vector<8x128xf32>
    %61 = arith.mulf %56, %60 : vector<8x128xf32>
    %62 = vector.broadcast %37 : vector<1x128xf32> to vector<8x128xf32>
    %63 = arith.mulf %61, %62 : vector<8x128xf32>
    %64 = vector.broadcast %38 : vector<1x128xf32> to vector<8x128xf32>
    %65 = arith.addf %63, %64 : vector<8x128xf32>
    %cst_28 = arith.constant 0.000000e+00 : f32
    %66 = vector.broadcast %cst_28 : f32 to vector<8x128xf32>
    %67 = arith.maximumf %65, %66 : vector<8x128xf32>
    %68 = arith.truncf %67 : vector<8x128xf32> to vector<8x128xbf16>
    %c0_29 = arith.constant 0 : index
    %c0_30 = arith.constant 0 : index
    %69 = vector.load %arg4[%c0_29, %c0_30] : memref<128x128xbf16, #tpu.memory_space<vmem>>, vector<128x128xbf16>
    %c3 = arith.constant 3 : index
    %c0_31 = arith.constant 0 : index
    %70 = vector.load %arg7[%c3, %c0_31] : memref<6x128xf32, #tpu.memory_space<vmem>>, vector<1x128xf32>
    %c4 = arith.constant 4 : index
    %c0_32 = arith.constant 0 : index
    %71 = vector.load %arg7[%c4, %c0_32] : memref<6x128xf32, #tpu.memory_space<vmem>>, vector<1x128xf32>
    %c5 = arith.constant 5 : index
    %c0_33 = arith.constant 0 : index
    %72 = vector.load %arg7[%c5, %c0_33] : memref<6x128xf32, #tpu.memory_space<vmem>>, vector<1x128xf32>
    %cst_34 = arith.constant dense<0.000000e+00> : vector<8x128xf32>
    %73 = tpu.matmul %68, %69, %cst_34 {dimension_numbers = #tpu.dot_dimension_numbers<[1], [0], [0], [1], [0, 0, 1, 1], [], []>} : vector<8x128xbf16>, vector<128x128xbf16>, vector<8x128xf32> -> vector<8x128xf32>
    %74 = vector.broadcast %70 : vector<1x128xf32> to vector<8x128xf32>
    %75 = arith.addf %73, %74 : vector<8x128xf32>
    %cst_35 = arith.constant dense<0.000000e+00> : vector<8xf32>
    %76 = vector.multi_reduction <add>, %75, %cst_35 [1] : vector<8x128xf32> to vector<8xf32>
    %77 = vector.shape_cast %76 : vector<8xf32> to vector<8x1xf32>
    %78 = arith.mulf %75, %75 : vector<8x128xf32>
    %cst_36 = arith.constant dense<0.000000e+00> : vector<8xf32>
    %79 = vector.multi_reduction <add>, %78, %cst_36 [1] : vector<8x128xf32> to vector<8xf32>
    %80 = vector.shape_cast %79 : vector<8xf32> to vector<8x1xf32>
    %cst_37 = arith.constant 3.125000e-02 : f32
    %81 = vector.broadcast %cst_37 : f32 to vector<8x1xf32>
    %82 = arith.mulf %77, %81 : vector<8x1xf32>
    %cst_38 = arith.constant 3.125000e-02 : f32
    %83 = vector.broadcast %cst_38 : f32 to vector<8x1xf32>
    %84 = arith.mulf %80, %83 : vector<8x1xf32>
    %85 = arith.mulf %82, %82 : vector<8x1xf32>
    %86 = arith.subf %84, %85 : vector<8x1xf32>
    %cst_39 = arith.constant 0.000000e+00 : f32
    %87 = vector.broadcast %cst_39 : f32 to vector<8x1xf32>
    %88 = arith.maximumf %86, %87 : vector<8x1xf32>
    %89 = vector.broadcast %82 : vector<8x1xf32> to vector<8x128xf32>
    %90 = arith.subf %75, %89 : vector<8x128xf32>
    %cst_40 = arith.constant 9.99999974E-6 : f32
    %91 = vector.broadcast %cst_40 : f32 to vector<8x1xf32>
    %92 = arith.addf %88, %91 : vector<8x1xf32>
    %93 = math.rsqrt %92 : vector<8x1xf32>
    %94 = vector.broadcast %93 : vector<8x1xf32> to vector<8x128xf32>
    %95 = arith.mulf %90, %94 : vector<8x128xf32>
    %96 = vector.broadcast %71 : vector<1x128xf32> to vector<8x128xf32>
    %97 = arith.mulf %95, %96 : vector<8x128xf32>
    %98 = vector.broadcast %72 : vector<1x128xf32> to vector<8x128xf32>
    %99 = arith.addf %97, %98 : vector<8x128xf32>
    %cst_41 = arith.constant 0.000000e+00 : f32
    %100 = vector.broadcast %cst_41 : f32 to vector<8x128xf32>
    %101 = arith.maximumf %99, %100 : vector<8x128xf32>
    %102 = arith.truncf %101 : vector<8x128xf32> to vector<8x128xbf16>
    %c0_42 = arith.constant 0 : index
    %c0_43 = arith.constant 0 : index
    %103 = vector.load %arg5[%c0_42, %c0_43] : memref<128x128xbf16, #tpu.memory_space<vmem>>, vector<128x128xbf16>
    %cst_44 = arith.constant dense<0.000000e+00> : vector<8x128xf32>
    %104 = tpu.matmul %102, %103, %cst_44 {dimension_numbers = #tpu.dot_dimension_numbers<[1], [0], [0], [1], [0, 0, 1, 1], [], []>} : vector<8x128xbf16>, vector<128x128xbf16>, vector<8x128xf32> -> vector<8x128xf32>
    %c0_45 = arith.constant 0 : index
    %c0_46 = arith.constant 0 : index
    %105 = vector.load %arg8[%c0_45, %c0_46] : memref<1x128xf32, #tpu.memory_space<vmem>>, vector<1x128xf32>
    %106 = vector.broadcast %105 : vector<1x128xf32> to vector<8x128xf32>
    %107 = arith.addf %104, %106 : vector<8x128xf32>
    %108 = math.tanh %107 : vector<8x128xf32>
    %c0_47 = arith.constant 0 : index
    %c0_48 = arith.constant 0 : index
    %109 = vector.load %arg9[%c0_47, %c0_48] : memref<8x128xf32, #tpu.memory_space<vmem>>, vector<8x128xf32>
    tpu.vector_store %arg9[%c0_47, %c0_48], %108 {strides = array<i32>} : memref<8x128xf32, #tpu.memory_space<vmem>>, vector<8x128xf32>,
    return
  }
  func.func @transform_0(%arg0: i32) -> (i32, i32) {
    %c0_i32 = arith.constant 0 : i32
    %c0_i32_0 = arith.constant 0 : i32
    return %arg0, %c0_i32 : i32, i32
  }
  func.func @transform_1(%arg0: i32) -> (i32, i32) {
    %c0_i32 = arith.constant 0 : i32
    %c0_i32_0 = arith.constant 0 : i32
    %c0_i32_1 = arith.constant 0 : i32
    return %c0_i32, %c0_i32_0 : i32, i32
  }
  func.func @transform_2(%arg0: i32) -> (i32, i32) {
    %c0_i32 = arith.constant 0 : i32
    %c0_i32_0 = arith.constant 0 : i32
    %c0_i32_1 = arith.constant 0 : i32
    return %c0_i32, %c0_i32_0 : i32, i32
  }
  func.func @transform_3(%arg0: i32) -> (i32, i32) {
    %c0_i32 = arith.constant 0 : i32
    %c0_i32_0 = arith.constant 0 : i32
    %c0_i32_1 = arith.constant 0 : i32
    return %c0_i32, %c0_i32_0 : i32, i32
  }
  func.func @transform_4(%arg0: i32) -> (i32, i32) {
    %c0_i32 = arith.constant 0 : i32
    %c0_i32_0 = arith.constant 0 : i32
    %c0_i32_1 = arith.constant 0 : i32
    return %c0_i32, %c0_i32_0 : i32, i32
  }
  func.func @transform_5(%arg0: i32) -> (i32, i32) {
    %c0_i32 = arith.constant 0 : i32
    %c0_i32_0 = arith.constant 0 : i32
    %c0_i32_1 = arith.constant 0 : i32
    return %c0_i32, %c0_i32_0 : i32, i32
  }
  func.func @transform_6(%arg0: i32) -> (i32, i32) {
    %c0_i32 = arith.constant 0 : i32
    %c0_i32_0 = arith.constant 0 : i32
    %c0_i32_1 = arith.constant 0 : i32
    return %c0_i32, %c0_i32_0 : i32, i32
  }
  func.func @transform_7(%arg0: i32) -> (i32, i32) {
    %c0_i32 = arith.constant 0 : i32
    %c0_i32_0 = arith.constant 0 : i32
    %c0_i32_1 = arith.constant 0 : i32
    return %c0_i32, %c0_i32_0 : i32, i32
  }
  func.func @transform_8(%arg0: i32) -> (i32, i32) {
    %c0_i32 = arith.constant 0 : i32
    %c0_i32_0 = arith.constant 0 : i32
    return %arg0, %c0_i32 : i32, i32
  }
}

</mosaic_0001>

<llo_original>
// kernel: tpu_custom_call.1
$region0: #{tpu_custom_call.1}
  #allocation0 [shape = 'u32[]', space=smem, size = 0x4, offset = 0x4, fixed_abs, tag = 'smem constant byte address 0x4 - core index']
  #allocation1 [shape = 'u32[72,128]{1,0:T(1,128)}', space=vmem, size = 0x9000, scoped, tag = 'internal scratch']
  %s0 = inlined_call_operand.hbm [shape: f32[8,1024], index: 0, kind: input, shape index: {}]
  %s1 = inlined_call_operand.hbm [shape: bf16[1024,128], index: 1, kind: input, shape index: {}]
  %s2 = inlined_call_operand.hbm [shape: bf16[128,128], index: 2, kind: input, shape index: {}]
  %s3 = inlined_call_operand.hbm [shape: bf16[128,128], index: 3, kind: input, shape index: {}]
  %s4 = inlined_call_operand.hbm [shape: bf16[128,128], index: 4, kind: input, shape index: {}]
  %s5 = inlined_call_operand.vmem [shape: f32[3,128], index: 5, kind: input, shape index: {}]
  %s6 = inlined_call_operand.hbm [shape: f32[6,128], index: 6, kind: input, shape index: {}]
  %s7 = inlined_call_operand.vmem [shape: f32[1,128], index: 7, kind: input, shape index: {}]
  %s8 = inlined_call_operand.hbm [shape: f32[8,128], index: 8, kind: output, shape index: {}]
  %s9 = sld [smem:[#allocation0]]
  $region66: #{tpu_custom_call.1} parent=0
    _
  %s11 = ssub.s32 1, %s9
  %s12 = scalar_select 0, %s11, %s9
  $region1: #{tpu_custom_call.1} parent=0
    #allocation2 [shape = 'u8[32768]{0}', space=vmem, size = 0x8000, scoped, tag = 'input window, operand 0, single buffered']
    #allocation3 [shape = 's32[1]{0}', space=sflag, size = 0x4, scoped, tag = 'scoped memory for tpu_custom_call.1']
    #allocation4 [shape = 's32[1]{0}', space=sflag, size = 0x4, scoped, tag = 'scoped memory for tpu_custom_call.1']
    #allocation5 [shape = 'u8[262144]{0}', space=vmem, size = 0x40000, scoped, tag = 'input window, operand 1, single buffered']
    #allocation6 [shape = 's32[1]{0}', space=sflag, size = 0x4, scoped, tag = 'scoped memory for tpu_custom_call.1']
    #allocation7 [shape = 'u8[32768]{0}', space=vmem, size = 0x8000, scoped, tag = 'input window, operand 2, single buffered']
    #allocation8 [shape = 'u8[32768]{0}', space=vmem, size = 0x8000, scoped, tag = 'input window, operand 3, single buffered']
    #allocation9 [shape = 's32[1]{0}', space=sflag, size = 0x4, scoped, tag = 'scoped memory for tpu_custom_call.1']
    #allocation10 [shape = 'u8[32768]{0}', space=vmem, size = 0x8000, scoped, tag = 'input window, operand 4, single buffered']
    #allocation11 [shape = 'u8[4096]{0}', space=vmem, size = 0x1000, scoped, tag = 'input window, operand 6, single buffered']
    #allocation12 [shape = 's32[1]{0}', space=sflag, size = 0x4, scoped, tag = 'scoped memory for tpu_custom_call.1']
    #allocation13 [shape = 'u8[4096]{0}', space=vmem, size = 0x1000, scoped, tag = 'output window, operand 0, single buffered']
    %13 = vsyncpa [#allocation3], 0
    %14 = vsyncpa [#allocation6], 0
    %15 = vsyncpa [#allocation9], 0
    %16 = vsyncpa [#allocation12], 0
    %17 = vsyncpa [#allocation4], 0
    // Predicated region
    $region2: #{tpu_custom_call.1} parent=1 // pred_check
      _
    $region3: #{tpu_custom_call.1} parent=1 // pred_check_branch
      %19 = sbr.rel (0) target = $region5
    $region4: #{tpu_custom_call.1} parent=1 // pred_region
      %21 = vsyncadd [#allocation3], 0
      %s23 = sshll.u32 %s0, 4
      %s24 = int_to_ptr.hbm [resolvable:$true] %s23
      %s25 = sshll.u32 [#allocation2], 4
      %s26 = int_to_ptr.vmem [resolvable:$true] %s25
      %28 = dma.hbm_to_vmem [thread:$0]  %s24, 1024, %s26, [#allocation3]
    $region5: #{tpu_custom_call.1} parent=1 // pred_fallthru
      _
    // Predicated region
    $region6: #{tpu_custom_call.1} parent=1 // pred_check
      _
    $region7: #{tpu_custom_call.1} parent=1 // pred_check_branch
      %30 = sbr.rel (0) target = $region9
    $region8: #{tpu_custom_call.1} parent=1 // pred_region
      %32 = vsyncadd [#allocation6], 0
      %s33 = sshll.u32 %s1, 4
      %s34 = int_to_ptr.hbm [resolvable:$true] %s33
      %s35 = sshll.u32 [#allocation5], 4
      %s36 = int_to_ptr.vmem [resolvable:$true] %s35
      %41 = dma.hbm_to_vmem [thread:$0]  %s34, 8192, %s36, [#allocation6], 64, 64, 4
    $region9: #{tpu_custom_call.1} parent=1 // pred_fallthru
      _
    // Predicated region
    $region10: #{tpu_custom_call.1} parent=1 // pred_check
      _
    $region11: #{tpu_custom_call.1} parent=1 // pred_check_branch
      %43 = sbr.rel (0) target = $region13
    $region12: #{tpu_custom_call.1} parent=1 // pred_region
      %45 = vsyncadd [#allocation6], 0
      %s46 = sshll.u32 %s2, 4
      %s47 = int_to_ptr.hbm [resolvable:$true] %s46
      %s48 = sshll.u32 [#allocation7], 4
      %s49 = int_to_ptr.vmem [resolvable:$true] %s48
      %54 = dma.hbm_to_vmem [thread:$0]  %s47, 1024, %s49, [#allocation6], 64, 64, 4
    $region13: #{tpu_custom_call.1} parent=1 // pred_fallthru
      _
    // Predicated region
    $region14: #{tpu_custom_call.1} parent=1 // pred_check
      _
    $region15: #{tpu_custom_call.1} parent=1 // pred_check_branch
      %56 = sbr.rel (0) target = $region17
    $region16: #{tpu_custom_call.1} parent=1 // pred_region
      %58 = vsyncadd [#allocation9], 0
      %s59 = sshll.u32 %s3, 4
      %s60 = int_to_ptr.hbm [resolvable:$true] %s59
      %s61 = sshll.u32 [#allocation8], 4
      %s62 = int_to_ptr.vmem [resolvable:$true] %s61
      %67 = dma.hbm_to_vmem [thread:$0]  %s60, 1024, %s62, [#allocation9], 64, 64, 4
    $region17: #{tpu_custom_call.1} parent=1 // pred_fallthru
      _
    // Predicated region
    $region18: #{tpu_custom_call.1} parent=1 // pred_check
      _
    $region19: #{tpu_custom_call.1} parent=1 // pred_check_branch
      %69 = sbr.rel (0) target = $region21
    $region20: #{tpu_custom_call.1} parent=1 // pred_region
      %71 = vsyncadd [#allocation9], 0
      %s72 = sshll.u32 %s4, 4
      %s73 = int_to_ptr.hbm [resolvable:$true] %s72
      %s74 = sshll.u32 [#allocation10], 4
      %s75 = int_to_ptr.vmem [resolvable:$true] %s74
      %80 = dma.hbm_to_vmem [thread:$0]  %s73, 1024, %s75, [#allocation9], 64, 64, 4
    $region21: #{tpu_custom_call.1} parent=1 // pred_fallthru
      _
    // Predicated region
    $region22: #{tpu_custom_call.1} parent=1 // pred_check
      _
    $region23: #{tpu_custom_call.1} parent=1 // pred_check_branch
      %82 = sbr.rel (0) target = $region25
    $region24: #{tpu_custom_call.1} parent=1 // pred_region
      _
    $region25: #{tpu_custom_call.1} parent=1 // pred_fallthru
      _
    // Predicated region
    $region26: #{tpu_custom_call.1} parent=1 // pred_check
      _
    $region27: #{tpu_custom_call.1} parent=1 // pred_check_branch
      %84 = sbr.rel (0) target = $region29
    $region28: #{tpu_custom_call.1} parent=1 // pred_region
      %86 = vsyncadd [#allocation12], 0
      %s88 = sshll.u32 %s6, 4
      %s89 = int_to_ptr.hbm [resolvable:$true] %s88
      %s90 = sshll.u32 [#allocation11], 4
      %s91 = int_to_ptr.vmem [resolvable:$true] %s90
      %93 = dma.hbm_to_vmem [thread:$0]  %s89, 128, %s91, [#allocation12]
    $region29: #{tpu_custom_call.1} parent=1 // pred_fallthru
      _
    // Predicated region
    $region30: #{tpu_custom_call.1} parent=1 // pred_check
      _
    $region31: #{tpu_custom_call.1} parent=1 // pred_check_branch
      %95 = sbr.rel (0) target = $region33
    $region32: #{tpu_custom_call.1} parent=1 // pred_region
      _
    $region33: #{tpu_custom_call.1} parent=1 // pred_fallthru
      _
    // Predicated region
    $region34: #{tpu_custom_call.1} parent=1 // pred_check
      _
    $region35: #{tpu_custom_call.1} parent=1 // pred_check_branch
      %97 = sbr.rel (0) target = $region37
    $region36: #{tpu_custom_call.1} parent=1 // pred_region
      %99 = dma.done [#allocation3], 1024
    $region37: #{tpu_custom_call.1} parent=1 // pred_fallthru
      _
    // Predicated region
    $region38: #{tpu_custom_call.1} parent=1 // pred_check
      _
    $region39: #{tpu_custom_call.1} parent=1 // pred_check_branch
      %101 = sbr.rel (0) target = $region41
    $region40: #{tpu_custom_call.1} parent=1 // pred_region
      %103 = dma.done [#allocation6], 8192
    $region41: #{tpu_custom_call.1} parent=1 // pred_fallthru
      _
    // Predicated region
    $region42: #{tpu_custom_call.1} parent=1 // pred_check
      _
    $region43: #{tpu_custom_call.1} parent=1 // pred_check_branch
      %105 = sbr.rel (0) target = $region45
    $region44: #{tpu_custom_call.1} parent=1 // pred_region
      %107 = dma.done [#allocation6], 1024
    $region45: #{tpu_custom_call.1} parent=1 // pred_fallthru
      _
    // Predicated region
    $region46: #{tpu_custom_call.1} parent=1 // pred_check
      _
    $region47: #{tpu_custom_call.1} parent=1 // pred_check_branch
      %109 = sbr.rel (0) target = $region49
    $region48: #{tpu_custom_call.1} parent=1 // pred_region
      %111 = dma.done [#allocation9], 1024
    $region49: #{tpu_custom_call.1} parent=1 // pred_fallthru
      _
    // Predicated region
    $region50: #{tpu_custom_call.1} parent=1 // pred_check
      _
    $region51: #{tpu_custom_call.1} parent=1 // pred_check_branch
      %113 = sbr.rel (0) target = $region53
    $region52: #{tpu_custom_call.1} parent=1 // pred_region
      %115 = dma.done [#allocation9], 1024
    $region53: #{tpu_custom_call.1} parent=1 // pred_fallthru
      _
    // Predicated region
    $region54: #{tpu_custom_call.1} parent=1 // pred_check
      _
    $region55: #{tpu_custom_call.1} parent=1 // pred_check_branch
      %117 = sbr.rel (0) target = $region57
    $region56: #{tpu_custom_call.1} parent=1 // pred_region
      %119 = dma.done [#allocation12], 128
    $region57: #{tpu_custom_call.1} parent=1 // pred_fallthru
      _
    %v120 = vld [vmem:[#allocation2] sm:$0xff]
    %v121 = vld [vmem:[#allocation2 + $0x8] sm:$0xff]
    %v122 = vld [vmem:[#allocation2 + $0x10] sm:$0xff]
    %v123 = vld [vmem:[#allocation2 + $0x18] sm:$0xff]
    %v124 = vld [vmem:[#allocation2 + $0x20] sm:$0xff]
    %v125 = vld [vmem:[#allocation2 + $0x28] sm:$0xff]
    %v126 = vld [vmem:[#allocation2 + $0x30] sm:$0xff]
    %v127 = vld [vmem:[#allocation2 + $0x38] sm:$0xff]
    %v128 = vpack.c.bf16 %v120, %v120
    %v129 = vpack.c.bf16 %v121, %v121
    %v130 = vpack.c.bf16 %v122, %v122
    %v131 = vpack.c.bf16 %v123, %v123
    %v132 = vpack.c.bf16 %v124, %v124
    %v133 = vpack.c.bf16 %v125, %v125
    %v134 = vpack.c.bf16 %v126, %v126
    %v135 = vpack.c.bf16 %v127, %v127
    %v136 = vld [vmem:[#allocation5] sm:$0xf]
    %v137 = vld [vmem:[#allocation5 + $0x4] sm:$0xf]
    %v138 = vld [vmem:[#allocation5 + $0x8] sm:$0xf]
    %v139 = vld [vmem:[#allocation5 + $0xc] sm:$0xf]
    %v140 = vld [vmem:[#allocation5 + $0x10] sm:$0xf]
    %v141 = vld [vmem:[#allocation5 + $0x14] sm:$0xf]
    %v142 = vld [vmem:[#allocation5 + $0x18] sm:$0xf]
    %v143 = vld [vmem:[#allocation5 + $0x1c] sm:$0xf]
    %v144 = vld [vmem:[#allocation5 + $0x20] sm:$0xf]
    %v145 = vld [vmem:[#allocation5 + $0x24] sm:$0xf]
    %v146 = vld [vmem:[#allocation5 + $0x28] sm:$0xf]
    %v147 = vld [vmem:[#allocation5 + $0x2c] sm:$0xf]
    %v148 = vld [vmem:[#allocation5 + $0x30] sm:$0xf]
    %v149 = vld [vmem:[#allocation5 + $0x34] sm:$0xf]
    %v150 = vld [vmem:[#allocation5 + $0x38] sm:$0xf]
    %v151 = vld [vmem:[#allocation5 + $0x3c] sm:$0xf]
    %v152 = vld [vmem:[#allocation5 + $0x40] sm:$0xf]
    %v153 = vld [vmem:[#allocation5 + $0x44] sm:$0xf]
    %v154 = vld [vmem:[#allocation5 + $0x48] sm:$0xf]
    %v155 = vld [vmem:[#allocation5 + $0x4c] sm:$0xf]
    %v156 = vld [vmem:[#allocation5 + $0x50] sm:$0xf]
    %v157 = vld [vmem:[#allocation5 + $0x54] sm:$0xf]
    %v158 = vld [vmem:[#allocation5 + $0x58] sm:$0xf]
    %v159 = vld [vmem:[#allocation5 + $0x5c] sm:$0xf]
    %v160 = vld [vmem:[#allocation5 + $0x60] sm:$0xf]
    %v161 = vld [vmem:[#allocation5 + $0x64] sm:$0xf]
    %v162 = vld [vmem:[#allocation5 + $0x68] sm:$0xf]
    %v163 = vld [vmem:[#allocation5 + $0x6c] sm:$0xf]
    %v164 = vld [vmem:[#allocation5 + $0x70] sm:$0xf]
    %v165 = vld [vmem:[#allocation5 + $0x74] sm:$0xf]
    %v166 = vld [vmem:[#allocation5 + $0x78] sm:$0xf]
    %v167 = vld [vmem:[#allocation5 + $0x7c] sm:$0xf]
    %v168 = vld [vmem:[#allocation5 + $0x80] sm:$0xf]
    %v169 = vld [vmem:[#allocation5 + $0x84] sm:$0xf]
    %v170 = vld [vmem:[#allocation5 + $0x88] sm:$0xf]
    %v171 = vld [vmem:[#allocation5 + $0x8c] sm:$0xf]
    %v172 = vld [vmem:[#allocation5 + $0x90] sm:$0xf]
    %v173 = vld [vmem:[#allocation5 + $0x94] sm:$0xf]
    %v174 = vld [vmem:[#allocation5 + $0x98] sm:$0xf]
    %v175 = vld [vmem:[#allocation5 + $0x9c] sm:$0xf]
    %v176 = vld [vmem:[#allocation5 + $0xa0] sm:$0xf]
    %v177 = vld [vmem:[#allocation5 + $0xa4] sm:$0xf]
    %v178 = vld [vmem:[#allocation5 + $0xa8] sm:$0xf]
    %v179 = vld [vmem:[#allocation5 + $0xac] sm:$0xf]
    %v180 = vld [vmem:[#allocation5 + $0xb0] sm:$0xf]
    %v181 = vld [vmem:[#allocation5 + $0xb4] sm:$0xf]
    %v182 = vld [vmem:[#allocation5 + $0xb8] sm:$0xf]
    %v183 = vld [vmem:[#allocation5 + $0xbc] sm:$0xf]
    %v184 = vld [vmem:[#allocation5 + $0xc0] sm:$0xf]
    %v185 = vld [vmem:[#allocation5 + $0xc4] sm:$0xf]
    %v186 = vld [vmem:[#allocation5 + $0xc8] sm:$0xf]
    %v187 = vld [vmem:[#allocation5 + $0xcc] sm:$0xf]
    %v188 = vld [vmem:[#allocation5 + $0xd0] sm:$0xf]
    %v189 = vld [vmem:[#allocation5 + $0xd4] sm:$0xf]
    %v190 = vld [vmem:[#allocation5 + $0xd8] sm:$0xf]
    %v191 = vld [vmem:[#allocation5 + $0xdc] sm:$0xf]
    %v192 = vld [vmem:[#allocation5 + $0xe0] sm:$0xf]
    %v193 = vld [vmem:[#allocation5 + $0xe4] sm:$0xf]
    %v194 = vld [vmem:[#allocation5 + $0xe8] sm:$0xf]
    %v195 = vld [vmem:[#allocation5 + $0xec] sm:$0xf]
    %v196 = vld [vmem:[#allocation5 + $0xf0] sm:$0xf]
    %v197 = vld [vmem:[#allocation5 + $0xf4] sm:$0xf]
    %v198 = vld [vmem:[#allocation5 + $0xf8] sm:$0xf]
    %v199 = vld [vmem:[#allocation5 + $0xfc] sm:$0xf]
    %v200 = vld [vmem:[#allocation5 + $0x100] sm:$0xf]
    %v201 = vld [vmem:[#allocation5 + $0x104] sm:$0xf]
    %v202 = vld [vmem:[#allocation5 + $0x108] sm:$0xf]
    %v203 = vld [vmem:[#allocation5 + $0x10c] sm:$0xf]
    %v204 = vld [vmem:[#allocation5 + $0x110] sm:$0xf]
    %v205 = vld [vmem:[#allocation5 + $0x114] sm:$0xf]
    %v206 = vld [vmem:[#allocation5 + $0x118] sm:$0xf]
    %v207 = vld [vmem:[#allocation5 + $0x11c] sm:$0xf]
    %v208 = vld [vmem:[#allocation5 + $0x120] sm:$0xf]
    %v209 = vld [vmem:[#allocation5 + $0x124] sm:$0xf]
    %v210 = vld [vmem:[#allocation5 + $0x128] sm:$0xf]
    %v211 = vld [vmem:[#allocation5 + $0x12c] sm:$0xf]
    %v212 = vld [vmem:[#allocation5 + $0x130] sm:$0xf]
    %v213 = vld [vmem:[#allocation5 + $0x134] sm:$0xf]
    %v214 = vld [vmem:[#allocation5 + $0x138] sm:$0xf]
    %v215 = vld [vmem:[#allocation5 + $0x13c] sm:$0xf]
    %v216 = vld [vmem:[#allocation5 + $0x140] sm:$0xf]
    %v217 = vld [vmem:[#allocation5 + $0x144] sm:$0xf]
    %v218 = vld [vmem:[#allocation5 + $0x148] sm:$0xf]
    %v219 = vld [vmem:[#allocation5 + $0x14c] sm:$0xf]
    %v220 = vld [vmem:[#allocation5 + $0x150] sm:$0xf]
    %v221 = vld [vmem:[#allocation5 + $0x154] sm:$0xf]
    %v222 = vld [vmem:[#allocation5 + $0x158] sm:$0xf]
    %v223 = vld [vmem:[#allocation5 + $0x15c] sm:$0xf]
    %v224 = vld [vmem:[#allocation5 + $0x160] sm:$0xf]
    %v225 = vld [vmem:[#allocation5 + $0x164] sm:$0xf]
    %v226 = vld [vmem:[#allocation5 + $0x168] sm:$0xf]
    %v227 = vld [vmem:[#allocation5 + $0x16c] sm:$0xf]
    %v228 = vld [vmem:[#allocation5 + $0x170] sm:$0xf]
    %v229 = vld [vmem:[#allocation5 + $0x174] sm:$0xf]
    %v230 = vld [vmem:[#allocation5 + $0x178] sm:$0xf]
    %v231 = vld [vmem:[#allocation5 + $0x17c] sm:$0xf]
    %v232 = vld [vmem:[#allocation5 + $0x180] sm:$0xf]
    %v233 = vld [vmem:[#allocation5 + $0x184] sm:$0xf]
    %v234 = vld [vmem:[#allocation5 + $0x188] sm:$0xf]
    %v235 = vld [vmem:[#allocation5 + $0x18c] sm:$0xf]
    %v236 = vld [vmem:[#allocation5 + $0x190] sm:$0xf]
    %v237 = vld [vmem:[#allocation5 + $0x194] sm:$0xf]
    %v238 = vld [vmem:[#allocation5 + $0x198] sm:$0xf]
    %v239 = vld [vmem:[#allocation5 + $0x19c] sm:$0xf]
    %v240 = vld [vmem:[#allocation5 + $0x1a0] sm:$0xf]
    %v241 = vld [vmem:[#allocation5 + $0x1a4] sm:$0xf]
    %v242 = vld [vmem:[#allocation5 + $0x1a8] sm:$0xf]
    %v243 = vld [vmem:[#allocation5 + $0x1ac] sm:$0xf]
    %v244 = vld [vmem:[#allocation5 + $0x1b0] sm:$0xf]
    %v245 = vld [vmem:[#allocation5 + $0x1b4] sm:$0xf]
    %v246 = vld [vmem:[#allocation5 + $0x1b8] sm:$0xf]
    %v247 = vld [vmem:[#allocation5 + $0x1bc] sm:$0xf]
    %v248 = vld [vmem:[#allocation5 + $0x1c0] sm:$0xf]
    %v249 = vld [vmem:[#allocation5 + $0x1c4] sm:$0xf]
    %v250 = vld [vmem:[#allocation5 + $0x1c8] sm:$0xf]
    %v251 = vld [vmem:[#allocation5 + $0x1cc] sm:$0xf]
    %v252 = vld [vmem:[#allocation5 + $0x1d0] sm:$0xf]
    %v253 = vld [vmem:[#allocation5 + $0x1d4] sm:$0xf]
    %v254 = vld [vmem:[#allocation5 + $0x1d8] sm:$0xf]
    %v255 = vld [vmem:[#allocation5 + $0x1dc] sm:$0xf]
    %v256 = vld [vmem:[#allocation5 + $0x1e0] sm:$0xf]
    %v257 = vld [vmem:[#allocation5 + $0x1e4] sm:$0xf]
    %v258 = vld [vmem:[#allocation5 + $0x1e8] sm:$0xf]
    %v259 = vld [vmem:[#allocation5 + $0x1ec] sm:$0xf]
    %v260 = vld [vmem:[#allocation5 + $0x1f0] sm:$0xf]
    %v261 = vld [vmem:[#allocation5 + $0x1f4] sm:$0xf]
    %v262 = vld [vmem:[#allocation5 + $0x1f8] sm:$0xf]
    %v263 = vld [vmem:[#allocation5 + $0x1fc] sm:$0xf]
    %v264 = vld [vmem:[%s5] sm:$0x1]
    %v265 = vld [vmem:[%s5 + $0x1] sm:$0x1]
    %v266 = vld [vmem:[%s5 + $0x2] sm:$0x1]
    %v267 = vperm.slane %v264, 0
    %v396 = vunpack.c.l.b16 %v136
    %v397 = vunpack.c.l.b16 %v137
    %v398 = vunpack.c.l.b16 %v138
    %v399 = vunpack.c.l.b16 %v139
    %v400 = vunpack.c.l.b16 %v140
    %v401 = vunpack.c.l.b16 %v141
    %v402 = vunpack.c.l.b16 %v142
    %v403 = vunpack.c.l.b16 %v143
    %v404 = vunpack.c.l.b16 %v144
    %v405 = vunpack.c.l.b16 %v145
    %v406 = vunpack.c.l.b16 %v146
    %v407 = vunpack.c.l.b16 %v147
    %v408 = vunpack.c.l.b16 %v148
    %v409 = vunpack.c.l.b16 %v149
    %v410 = vunpack.c.l.b16 %v150
    %v411 = vunpack.c.l.b16 %v151
    %v412 = vunpack.c.l.b16 %v152
    %v413 = vunpack.c.l.b16 %v153
    %v414 = vunpack.c.l.b16 %v154
    %v415 = vunpack.c.l.b16 %v155
    %v416 = vunpack.c.l.b16 %v156
    %v417 = vunpack.c.l.b16 %v157
    %v418 = vunpack.c.l.b16 %v158
    %v419 = vunpack.c.l.b16 %v159
    %v420 = vunpack.c.l.b16 %v160
    %v421 = vunpack.c.l.b16 %v161
    %v422 = vunpack.c.l.b16 %v162
    %v423 = vunpack.c.l.b16 %v163
    %v424 = vunpack.c.l.b16 %v164
    %v425 = vunpack.c.l.b16 %v165
    %v426 = vunpack.c.l.b16 %v166
    %v427 = vunpack.c.l.b16 %v167
    %v428 = vunpack.c.l.b16 %v168
    %v429 = vunpack.c.l.b16 %v169
    %v430 = vunpack.c.l.b16 %v170
    %v431 = vunpack.c.l.b16 %v171
    %v432 = vunpack.c.l.b16 %v172
    %v433 = vunpack.c.l.b16 %v173
    %v434 = vunpack.c.l.b16 %v174
    %v435 = vunpack.c.l.b16 %v175
    %v436 = vunpack.c.l.b16 %v176
    %v437 = vunpack.c.l.b16 %v177
    %v438 = vunpack.c.l.b16 %v178
    %v439 = vunpack.c.l.b16 %v179
    %v440 = vunpack.c.l.b16 %v180
    %v441 = vunpack.c.l.b16 %v181
    %v442 = vunpack.c.l.b16 %v182
    %v443 = vunpack.c.l.b16 %v183
    %v444 = vunpack.c.l.b16 %v184
    %v445 = vunpack.c.l.b16 %v185
    %v446 = vunpack.c.l.b16 %v186
    %v447 = vunpack.c.l.b16 %v187
    %v448 = vunpack.c.l.b16 %v188
    %v449 = vunpack.c.l.b16 %v189
    %v450 = vunpack.c.l.b16 %v190
    %v451 = vunpack.c.l.b16 %v191
    %v452 = vunpack.c.l.b16 %v192
    %v453 = vunpack.c.l.b16 %v193
    %v454 = vunpack.c.l.b16 %v194
    %v455 = vunpack.c.l.b16 %v195
    %v456 = vunpack.c.l.b16 %v196
    %v457 = vunpack.c.l.b16 %v197
    %v458 = vunpack.c.l.b16 %v198
    %v459 = vunpack.c.l.b16 %v199
    %v460 = vunpack.c.l.b16 %v200
    %v461 = vunpack.c.l.b16 %v201
    %v462 = vunpack.c.l.b16 %v202
    %v463 = vunpack.c.l.b16 %v203
    %v464 = vunpack.c.l.b16 %v204
    %v465 = vunpack.c.l.b16 %v205
    %v466 = vunpack.c.l.b16 %v206
    %v467 = vunpack.c.l.b16 %v207
    %v468 = vunpack.c.l.b16 %v208
    %v469 = vunpack.c.l.b16 %v209
    %v470 = vunpack.c.l.b16 %v210
    %v471 = vunpack.c.l.b16 %v211
    %v472 = vunpack.c.l.b16 %v212
    %v473 = vunpack.c.l.b16 %v213
    %v474 = vunpack.c.l.b16 %v214
    %v475 = vunpack.c.l.b16 %v215
    %v476 = vunpack.c.l.b16 %v216
    %v477 = vunpack.c.l.b16 %v217
    %v478 = vunpack.c.l.b16 %v218
    %v479 = vunpack.c.l.b16 %v219
    %v480 = vunpack.c.l.b16 %v220
    %v481 = vunpack.c.l.b16 %v221
    %v482 = vunpack.c.l.b16 %v222
    %v483 = vunpack.c.l.b16 %v223
    %v484 = vunpack.c.l.b16 %v224
    %v485 = vunpack.c.l.b16 %v225
    %v486 = vunpack.c.l.b16 %v226
    %v487 = vunpack.c.l.b16 %v227
    %v488 = vunpack.c.l.b16 %v228
    %v489 = vunpack.c.l.b16 %v229
    %v490 = vunpack.c.l.b16 %v230
    %v491 = vunpack.c.l.b16 %v231
    %v492 = vunpack.c.l.b16 %v232
    %v493 = vunpack.c.l.b16 %v233
    %v494 = vunpack.c.l.b16 %v234
    %v495 = vunpack.c.l.b16 %v235
    %v496 = vunpack.c.l.b16 %v236
    %v497 = vunpack.c.l.b16 %v237
    %v498 = vunpack.c.l.b16 %v238
    %v499 = vunpack.c.l.b16 %v239
    %v500 = vunpack.c.l.b16 %v240
    %v501 = vunpack.c.l.b16 %v241
    %v502 = vunpack.c.l.b16 %v242
    %v503 = vunpack.c.l.b16 %v243
    %v504 = vunpack.c.l.b16 %v244
    %v505 = vunpack.c.l.b16 %v245
    %v506 = vunpack.c.l.b16 %v246
    %v507 = vunpack.c.l.b16 %v247
    %v508 = vunpack.c.l.b16 %v248
    %v509 = vunpack.c.l.b16 %v249
    %v510 = vunpack.c.l.b16 %v250
    %v511 = vunpack.c.l.b16 %v251
    %v512 = vunpack.c.l.b16 %v252
    %v513 = vunpack.c.l.b16 %v253
    %v514 = vunpack.c.l.b16 %v254
    %v515 = vunpack.c.l.b16 %v255
    %v516 = vunpack.c.l.b16 %v256
    %v517 = vunpack.c.l.b16 %v257
    %v518 = vunpack.c.l.b16 %v258
    %v519 = vunpack.c.l.b16 %v259
    %v520 = vunpack.c.l.b16 %v260
    %v521 = vunpack.c.l.b16 %v261
    %v522 = vunpack.c.l.b16 %v262
    %v523 = vunpack.c.l.b16 %v263
    %v524 = vpack.c.b16 %v397, %v396
    %v525 = vpack.c.b16 %v399, %v398
    %v526 = vpack.c.b16 %v401, %v400
    %v527 = vpack.c.b16 %v403, %v402
    %v528 = vpack.c.b16 %v405, %v404
    %v529 = vpack.c.b16 %v407, %v406
    %v530 = vpack.c.b16 %v409, %v408
    %v531 = vpack.c.b16 %v411, %v410
    %v532 = vpack.c.b16 %v413, %v412
    %v533 = vpack.c.b16 %v415, %v414
    %v534 = vpack.c.b16 %v417, %v416
    %v535 = vpack.c.b16 %v419, %v418
    %v536 = vpack.c.b16 %v421, %v420
    %v537 = vpack.c.b16 %v423, %v422
    %v538 = vpack.c.b16 %v425, %v424
    %v539 = vpack.c.b16 %v427, %v426
    %v540 = vpack.c.b16 %v429, %v428
    %v541 = vpack.c.b16 %v431, %v430
    %v542 = vpack.c.b16 %v433, %v432
    %v543 = vpack.c.b16 %v435, %v434
    %v544 = vpack.c.b16 %v437, %v436
    %v545 = vpack.c.b16 %v439, %v438
    %v546 = vpack.c.b16 %v441, %v440
    %v547 = vpack.c.b16 %v443, %v442
    %v548 = vpack.c.b16 %v445, %v444
    %v549 = vpack.c.b16 %v447, %v446
    %v550 = vpack.c.b16 %v449, %v448
    %v551 = vpack.c.b16 %v451, %v450
    %v552 = vpack.c.b16 %v453, %v452
    %v553 = vpack.c.b16 %v455, %v454
    %v554 = vpack.c.b16 %v457, %v456
    %v555 = vpack.c.b16 %v459, %v458
    %v556 = vpack.c.b16 %v461, %v460
    %v557 = vpack.c.b16 %v463, %v462
    %v558 = vpack.c.b16 %v465, %v464
    %v559 = vpack.c.b16 %v467, %v466
    %v560 = vpack.c.b16 %v469, %v468
    %v561 = vpack.c.b16 %v471, %v470
    %v562 = vpack.c.b16 %v473, %v472
    %v563 = vpack.c.b16 %v475, %v474
    %v564 = vpack.c.b16 %v477, %v476
    %v565 = vpack.c.b16 %v479, %v478
    %v566 = vpack.c.b16 %v481, %v480
    %v567 = vpack.c.b16 %v483, %v482
    %v568 = vpack.c.b16 %v485, %v484
    %v569 = vpack.c.b16 %v487, %v486
    %v570 = vpack.c.b16 %v489, %v488
    %v571 = vpack.c.b16 %v491, %v490
    %v572 = vpack.c.b16 %v493, %v492
    %v573 = vpack.c.b16 %v495, %v494
    %v574 = vpack.c.b16 %v497, %v496
    %v575 = vpack.c.b16 %v499, %v498
    %v576 = vpack.c.b16 %v501, %v500
    %v577 = vpack.c.b16 %v503, %v502
    %v578 = vpack.c.b16 %v505, %v504
    %v579 = vpack.c.b16 %v507, %v506
    %v580 = vpack.c.b16 %v509, %v508
    %v581 = vpack.c.b16 %v511, %v510
    %v582 = vpack.c.b16 %v513, %v512
    %v583 = vpack.c.b16 %v515, %v514
    %v584 = vpack.c.b16 %v517, %v516
    %v585 = vpack.c.b16 %v519, %v518
    %v586 = vpack.c.b16 %v521, %v520
    %v587 = vpack.c.b16 %v523, %v522
    %652 = vmatpush.bf16.msra.mxu0 %v531
    %653 = vmatpush.bf16.msra.mxu0 %v530
    %654 = vmatpush.bf16.msra.mxu0 %v529
    %655 = vmatpush.bf16.msra.mxu0 %v528
    %656 = vmatpush.bf16.msra.mxu0 %v527
    %657 = vmatpush.bf16.msra.mxu0 %v526
    %658 = vmatpush.bf16.msra.mxu0 %v525
    %659 = vmatpush.bf16.msra.mxu0 %v524
    %660 = vmatmul.bf16.gmra.mxu0 %v128
    %v661 = vpop.f32.mrf.mxu0
    %v662 = vadd.f32 %v267, %v661
    %v663 = vpop.f32.mrf.mxu0
    %664 = vdwg.mxu0
    %665 = vmatpush.bf16.msra.mxu0 %v539
    %666 = vmatpush.bf16.msra.mxu0 %v538
    %667 = vmatpush.bf16.msra.mxu0 %v537
    %668 = vmatpush.bf16.msra.mxu0 %v536
    %669 = vmatpush.bf16.msra.mxu0 %v535
    %670 = vmatpush.bf16.msra.mxu0 %v534
    %671 = vmatpush.bf16.msra.mxu0 %v533
    %672 = vmatpush.bf16.msra.mxu0 %v532
    %673 = vmatmul.bf16.gmra.mxu0 %v129
    %v674 = vpop.f32.mrf.mxu0
    %v675 = vadd.f32 %v662, %v674
    %v676 = vpop.f32.mrf.mxu0
    %677 = vdwg.mxu0
    %678 = vmatpush.bf16.msra.mxu0 %v547
    %679 = vmatpush.bf16.msra.mxu0 %v546
    %680 = vmatpush.bf16.msra.mxu0 %v545
    %681 = vmatpush.bf16.msra.mxu0 %v544
    %682 = vmatpush.bf16.msra.mxu0 %v543
    %683 = vmatpush.bf16.msra.mxu0 %v542
    %684 = vmatpush.bf16.msra.mxu0 %v541
    %685 = vmatpush.bf16.msra.mxu0 %v540
    %686 = vmatmul.bf16.gmra.mxu0 %v130
    %v687 = vpop.f32.mrf.mxu0
    %v688 = vadd.f32 %v675, %v687
    %v689 = vpop.f32.mrf.mxu0
    %690 = vdwg.mxu0
    %691 = vmatpush.bf16.msra.mxu0 %v555
    %692 = vmatpush.bf16.msra.mxu0 %v554
    %693 = vmatpush.bf16.msra.mxu0 %v553
    %694 = vmatpush.bf16.msra.mxu0 %v552
    %695 = vmatpush.bf16.msra.mxu0 %v551
    %696 = vmatpush.bf16.msra.mxu0 %v550
    %697 = vmatpush.bf16.msra.mxu0 %v549
    %698 = vmatpush.bf16.msra.mxu0 %v548
    %699 = vmatmul.bf16.gmra.mxu0 %v131
    %v700 = vpop.f32.mrf.mxu0
    %v701 = vadd.f32 %v688, %v700
    %v702 = vpop.f32.mrf.mxu0
    %703 = vdwg.mxu0
    %704 = vmatpush.bf16.msra.mxu0 %v563
    %705 = vmatpush.bf16.msra.mxu0 %v562
    %706 = vmatpush.bf16.msra.mxu0 %v561
    %707 = vmatpush.bf16.msra.mxu0 %v560
    %708 = vmatpush.bf16.msra.mxu0 %v559
    %709 = vmatpush.bf16.msra.mxu0 %v558
    %710 = vmatpush.bf16.msra.mxu0 %v557
    %711 = vmatpush.bf16.msra.mxu0 %v556
    %712 = vmatmul.bf16.gmra.mxu0 %v132
    %v713 = vpop.f32.mrf.mxu0
    %v714 = vadd.f32 %v701, %v713
    %v715 = vpop.f32.mrf.mxu0
    %716 = vdwg.mxu0
    %717 = vmatpush.bf16.msra.mxu0 %v571
    %718 = vmatpush.bf16.msra.mxu0 %v570
    %719 = vmatpush.bf16.msra.mxu0 %v569
    %720 = vmatpush.bf16.msra.mxu0 %v568
    %721 = vmatpush.bf16.msra.mxu0 %v567
    %722 = vmatpush.bf16.msra.mxu0 %v566
    %723 = vmatpush.bf16.msra.mxu0 %v565
    %724 = vmatpush.bf16.msra.mxu0 %v564
    %725 = vmatmul.bf16.gmra.mxu0 %v133
    %v726 = vpop.f32.mrf.mxu0
    %v727 = vadd.f32 %v714, %v726
    %v728 = vpop.f32.mrf.mxu0
    %729 = vdwg.mxu0
    %730 = vmatpush.bf16.msra.mxu0 %v579
    %731 = vmatpush.bf16.msra.mxu0 %v578
    %732 = vmatpush.bf16.msra.mxu0 %v577
    %733 = vmatpush.bf16.msra.mxu0 %v576
    %734 = vmatpush.bf16.msra.mxu0 %v575
    %735 = vmatpush.bf16.msra.mxu0 %v574
    %736 = vmatpush.bf16.msra.mxu0 %v573
    %737 = vmatpush.bf16.msra.mxu0 %v572
    %738 = vmatmul.bf16.gmra.mxu0 %v134
    %v739 = vpop.f32.mrf.mxu0
    %v740 = vadd.f32 %v727, %v739
    %v741 = vpop.f32.mrf.mxu0
    %742 = vdwg.mxu0
    %743 = vmatpush.bf16.msra.mxu0 %v587
    %744 = vmatpush.bf16.msra.mxu0 %v586
    %745 = vmatpush.bf16.msra.mxu0 %v585
    %746 = vmatpush.bf16.msra.mxu0 %v584
    %747 = vmatpush.bf16.msra.mxu0 %v583
    %748 = vmatpush.bf16.msra.mxu0 %v582
    %749 = vmatpush.bf16.msra.mxu0 %v581
    %750 = vmatpush.bf16.msra.mxu0 %v580
    %751 = vmatmul.bf16.gmra.mxu0 %v135
    %v752 = vpop.f32.mrf.mxu0
    %v753 = vadd.f32 %v740, %v752
    %v754 = vpop.f32.mrf.mxu0
    %755 = vdwg.mxu0
    %756 = vadd.xlane.f32.xlu0 %v753
    %v757 = vpop.xlane.xlu0 %756
    %v758 = vmul.f32 %v753, %v753
    %759 = vadd.xlane.f32.xlu0 %v758
    %v760 = vpop.xlane.xlu0 %759
    %v761 = vmul.f32 %v757, 0.03125
    %v762 = vmul.f32 %v760, 0.03125
    %v763 = vmul.f32 %v761, %v761
    %v764 = vsub.f32 %v762, %v763
    %v765 = vmax.f32 %v764, 0.0
    %v766 = vsub.f32 %v753, %v761
    %v767 = vadd.f32 %v765, 1e-05
    %v768 = vrsqrt.pop %v767
    %v769 = vmul.f32 %v768, %v767
    %v770 = vmul.f32 %v769, %v768
    %v771 = vmul.f32 0.5, %v770
    %v772 = vsub.f32 1.5, %v771
    %v773 = vmul.f32 %v768, %v772
    %vm774 = vweird.f32 %v767
    %vm775 = vweird.f32 %v768
    %vm776 = vmor %vm774, %vm775
    %v777 = vsel %vm776, %v768, %v773
    %v778 = vmul.f32 %v766, %v777
    %v779 = vperm.slane %v265, 0
    %v780 = vmul.f32 %v778, %v779
    %v781 = vperm.slane %v266, 0
    %v782 = vadd.f32 %v780, %v781
    %v783 = vtanh.pop %v782
    %v784 = vpack.c.bf16 %v783, %v783
    %v785 = vld [vmem:[#allocation7] sm:$0xf]
    %v786 = vld [vmem:[#allocation7 + $0x4] sm:$0xf]
    %v787 = vld [vmem:[#allocation7 + $0x8] sm:$0xf]
    %v788 = vld [vmem:[#allocation7 + $0xc] sm:$0xf]
    %v789 = vld [vmem:[#allocation7 + $0x10] sm:$0xf]
    %v790 = vld [vmem:[#allocation7 + $0x14] sm:$0xf]
    %v791 = vld [vmem:[#allocation7 + $0x18] sm:$0xf]
    %v792 = vld [vmem:[#allocation7 + $0x1c] sm:$0xf]
    %v793 = vld [vmem:[#allocation7 + $0x20] sm:$0xf]
    %v794 = vld [vmem:[#allocation7 + $0x24] sm:$0xf]
    %v795 = vld [vmem:[#allocation7 + $0x28] sm:$0xf]
    %v796 = vld [vmem:[#allocation7 + $0x2c] sm:$0xf]
    %v797 = vld [vmem:[#allocation7 + $0x30] sm:$0xf]
    %v798 = vld [vmem:[#allocation7 + $0x34] sm:$0xf]
    %v799 = vld [vmem:[#allocation7 + $0x38] sm:$0xf]
    %v800 = vld [vmem:[#allocation7 + $0x3c] sm:$0xf]
    %v801 = vld [vmem:[#allocation11] sm:$0x1]
    %v802 = vld [vmem:[#allocation11 + $0x1] sm:$0x1]
    %v803 = vld [vmem:[#allocation11 + $0x2] sm:$0x1]
    %v804 = vperm.slane %v801, 0
    %v821 = vunpack.c.l.b16 %v785
    %v822 = vunpack.c.l.b16 %v786
    %v823 = vunpack.c.l.b16 %v787
    %v824 = vunpack.c.l.b16 %v788
    %v825 = vunpack.c.l.b16 %v789
    %v826 = vunpack.c.l.b16 %v790
    %v827 = vunpack.c.l.b16 %v791
    %v828 = vunpack.c.l.b16 %v792
    %v829 = vunpack.c.l.b16 %v793
    %v830 = vunpack.c.l.b16 %v794
    %v831 = vunpack.c.l.b16 %v795
    %v832 = vunpack.c.l.b16 %v796
    %v833 = vunpack.c.l.b16 %v797
    %v834 = vunpack.c.l.b16 %v798
    %v835 = vunpack.c.l.b16 %v799
    %v836 = vunpack.c.l.b16 %v800
    %v837 = vpack.c.b16 %v822, %v821
    %v838 = vpack.c.b16 %v824, %v823
    %v839 = vpack.c.b16 %v826, %v825
    %v840 = vpack.c.b16 %v828, %v827
    %v841 = vpack.c.b16 %v830, %v829
    %v842 = vpack.c.b16 %v832, %v831
    %v843 = vpack.c.b16 %v834, %v833
    %v844 = vpack.c.b16 %v836, %v835
    %853 = vmatpush.bf16.msra.mxu0 %v844
    %854 = vmatpush.bf16.msra.mxu0 %v843
    %855 = vmatpush.bf16.msra.mxu0 %v842
    %856 = vmatpush.bf16.msra.mxu0 %v841
    %857 = vmatpush.bf16.msra.mxu0 %v840
    %858 = vmatpush.bf16.msra.mxu0 %v839
    %859 = vmatpush.bf16.msra.mxu0 %v838
    %860 = vmatpush.bf16.msra.mxu0 %v837
    %861 = vmatmul.bf16.gmra.mxu0 %v784
    %v862 = vpop.f32.mrf.mxu0
    %v863 = vadd.f32 %v804, %v862
    %v864 = vpop.f32.mrf.mxu0
    %865 = vdwg.mxu0
    %866 = vadd.xlane.f32.xlu0 %v863
    %v867 = vpop.xlane.xlu0 %866
    %v868 = vmul.f32 %v863, %v863
    %869 = vadd.xlane.f32.xlu0 %v868
    %v870 = vpop.xlane.xlu0 %869
    %v871 = vmul.f32 %v867, 0.03125
    %v872 = vmul.f32 %v870, 0.03125
    %v873 = vmul.f32 %v871, %v871
    %v874 = vsub.f32 %v872, %v873
    %v875 = vmax.f32 %v874, 0.0
    %v876 = vsub.f32 %v863, %v871
    %v877 = vadd.f32 %v875, 1e-05
    %v878 = vrsqrt.pop %v877
    %v879 = vmul.f32 %v878, %v877
    %v880 = vmul.f32 %v879, %v878
    %v881 = vmul.f32 0.5, %v880
    %v882 = vsub.f32 1.5, %v881
    %v883 = vmul.f32 %v878, %v882
    %vm884 = vweird.f32 %v877
    %vm885 = vweird.f32 %v878
    %vm886 = vmor %vm884, %vm885
    %v887 = vsel %vm886, %v878, %v883
    %v888 = vmul.f32 %v876, %v887
    %v889 = vperm.slane %v802, 0
    %v890 = vmul.f32 %v888, %v889
    %v891 = vperm.slane %v803, 0
    %v892 = vadd.f32 %v890, %v891
    %v893 = vmax.f32 %v892, 0.0
    %v894 = vpack.c.bf16 %v893, %v893
    %v895 = vld [vmem:[#allocation8] sm:$0xf]
    %v896 = vld [vmem:[#allocation8 + $0x4] sm:$0xf]
    %v897 = vld [vmem:[#allocation8 + $0x8] sm:$0xf]
    %v898 = vld [vmem:[#allocation8 + $0xc] sm:$0xf]
    %v899 = vld [vmem:[#allocation8 + $0x10] sm:$0xf]
    %v900 = vld [vmem:[#allocation8 + $0x14] sm:$0xf]
    %v901 = vld [vmem:[#allocation8 + $0x18] sm:$0xf]
    %v902 = vld [vmem:[#allocation8 + $0x1c] sm:$0xf]
    %v903 = vld [vmem:[#allocation8 + $0x20] sm:$0xf]
    %v904 = vld [vmem:[#allocation8 + $0x24] sm:$0xf]
    %v905 = vld [vmem:[#allocation8 + $0x28] sm:$0xf]
    %v906 = vld [vmem:[#allocation8 + $0x2c] sm:$0xf]
    %v907 = vld [vmem:[#allocation8 + $0x30] sm:$0xf]
    %v908 = vld [vmem:[#allocation8 + $0x34] sm:$0xf]
    %v909 = vld [vmem:[#allocation8 + $0x38] sm:$0xf]
    %v910 = vld [vmem:[#allocation8 + $0x3c] sm:$0xf]
    %v911 = vld [vmem:[#allocation11 + $0x3] sm:$0x1]
    %v912 = vld [vmem:[#allocation11 + $0x4] sm:$0x1]
    %v913 = vld [vmem:[#allocation11 + $0x5] sm:$0x1]
    %v914 = vperm.slane %v911, 0
    %v931 = vunpack.c.l.b16 %v895
    %v932 = vunpack.c.l.b16 %v896
    %v933 = vunpack.c.l.b16 %v897
    %v934 = vunpack.c.l.b16 %v898
    %v935 = vunpack.c.l.b16 %v899
    %v936 = vunpack.c.l.b16 %v900
    %v937 = vunpack.c.l.b16 %v901
    %v938 = vunpack.c.l.b16 %v902
    %v939 = vunpack.c.l.b16 %v903
    %v940 = vunpack.c.l.b16 %v904
    %v941 = vunpack.c.l.b16 %v905
    %v942 = vunpack.c.l.b16 %v906
    %v943 = vunpack.c.l.b16 %v907
    %v944 = vunpack.c.l.b16 %v908
    %v945 = vunpack.c.l.b16 %v909
    %v946 = vunpack.c.l.b16 %v910
    %v947 = vpack.c.b16 %v932, %v931
    %v948 = vpack.c.b16 %v934, %v933
    %v949 = vpack.c.b16 %v936, %v935
    %v950 = vpack.c.b16 %v938, %v937
    %v951 = vpack.c.b16 %v940, %v939
    %v952 = vpack.c.b16 %v942, %v941
    %v953 = vpack.c.b16 %v944, %v943
    %v954 = vpack.c.b16 %v946, %v945
    %963 = vmatpush.bf16.msra.mxu0 %v954
    %964 = vmatpush.bf16.msra.mxu0 %v953
    %965 = vmatpush.bf16.msra.mxu0 %v952
    %966 = vmatpush.bf16.msra.mxu0 %v951
    %967 = vmatpush.bf16.msra.mxu0 %v950
    %968 = vmatpush.bf16.msra.mxu0 %v949
    %969 = vmatpush.bf16.msra.mxu0 %v948
    %970 = vmatpush.bf16.msra.mxu0 %v947
    %971 = vmatmul.bf16.gmra.mxu0 %v894
    %v972 = vpop.f32.mrf.mxu0
    %v973 = vadd.f32 %v914, %v972
    %v974 = vpop.f32.mrf.mxu0
    %975 = vdwg.mxu0
    %976 = vadd.xlane.f32.xlu0 %v973
    %v977 = vpop.xlane.xlu0 %976
    %v978 = vmul.f32 %v973, %v973
    %979 = vadd.xlane.f32.xlu0 %v978
    %v980 = vpop.xlane.xlu0 %979
    %v981 = vmul.f32 %v977, 0.03125
    %v982 = vmul.f32 %v980, 0.03125
    %v983 = vmul.f32 %v981, %v981
    %v984 = vsub.f32 %v982, %v983
    %v985 = vmax.f32 %v984, 0.0
    %v986 = vsub.f32 %v973, %v981
    %v987 = vadd.f32 %v985, 1e-05
    %v988 = vrsqrt.pop %v987
    %v989 = vmul.f32 %v988, %v987
    %v990 = vmul.f32 %v989, %v988
    %v991 = vmul.f32 0.5, %v990
    %v992 = vsub.f32 1.5, %v991
    %v993 = vmul.f32 %v988, %v992
    %vm994 = vweird.f32 %v987
    %vm995 = vweird.f32 %v988
    %vm996 = vmor %vm994, %vm995
    %v997 = vsel %vm996, %v988, %v993
    %v998 = vmul.f32 %v986, %v997
    %v999 = vperm.slane %v912, 0
    %v1000 = vmul.f32 %v998, %v999
    %v1001 = vperm.slane %v913, 0
    %v1002 = vadd.f32 %v1000, %v1001
    %v1003 = vmax.f32 %v1002, 0.0
    %v1004 = vpack.c.bf16 %v1003, %v1003
    %v1005 = vld [vmem:[#allocation10] sm:$0xf]
    %v1006 = vld [vmem:[#allocation10 + $0x4] sm:$0xf]
    %v1007 = vld [vmem:[#allocation10 + $0x8] sm:$0xf]
    %v1008 = vld [vmem:[#allocation10 + $0xc] sm:$0xf]
    %v1009 = vld [vmem:[#allocation10 + $0x10] sm:$0xf]
    %v1010 = vld [vmem:[#allocation10 + $0x14] sm:$0xf]
    %v1011 = vld [vmem:[#allocation10 + $0x18] sm:$0xf]
    %v1012 = vld [vmem:[#allocation10 + $0x1c] sm:$0xf]
    %v1013 = vld [vmem:[#allocation10 + $0x20] sm:$0xf]
    %v1014 = vld [vmem:[#allocation10 + $0x24] sm:$0xf]
    %v1015 = vld [vmem:[#allocation10 + $0x28] sm:$0xf]
    %v1016 = vld [vmem:[#allocation10 + $0x2c] sm:$0xf]
    %v1017 = vld [vmem:[#allocation10 + $0x30] sm:$0xf]
    %v1018 = vld [vmem:[#allocation10 + $0x34] sm:$0xf]
    %v1019 = vld [vmem:[#allocation10 + $0x38] sm:$0xf]
    %v1020 = vld [vmem:[#allocation10 + $0x3c] sm:$0xf]
    %v1021 = vld [vmem:[%s7] sm:$0x1]
    %v1023 = vperm.slane %v1021, 0
    %v1041 = vunpack.c.l.b16 %v1005
    %v1042 = vunpack.c.l.b16 %v1006
    %v1043 = vunpack.c.l.b16 %v1007
    %v1044 = vunpack.c.l.b16 %v1008
    %v1045 = vunpack.c.l.b16 %v1009
    %v1046 = vunpack.c.l.b16 %v1010
    %v1047 = vunpack.c.l.b16 %v1011
    %v1048 = vunpack.c.l.b16 %v1012
    %v1049 = vunpack.c.l.b16 %v1013
    %v1050 = vunpack.c.l.b16 %v1014
    %v1051 = vunpack.c.l.b16 %v1015
    %v1052 = vunpack.c.l.b16 %v1016
    %v1053 = vunpack.c.l.b16 %v1017
    %v1054 = vunpack.c.l.b16 %v1018
    %v1055 = vunpack.c.l.b16 %v1019
    %v1056 = vunpack.c.l.b16 %v1020
    %v1057 = vpack.c.b16 %v1042, %v1041
    %v1058 = vpack.c.b16 %v1044, %v1043
    %v1059 = vpack.c.b16 %v1046, %v1045
    %v1060 = vpack.c.b16 %v1048, %v1047
    %v1061 = vpack.c.b16 %v1050, %v1049
    %v1062 = vpack.c.b16 %v1052, %v1051
    %v1063 = vpack.c.b16 %v1054, %v1053
    %v1064 = vpack.c.b16 %v1056, %v1055
    %1073 = vmatpush.bf16.msra.mxu0 %v1064
    %1074 = vmatpush.bf16.msra.mxu0 %v1063
    %1075 = vmatpush.bf16.msra.mxu0 %v1062
    %1076 = vmatpush.bf16.msra.mxu0 %v1061
    %1077 = vmatpush.bf16.msra.mxu0 %v1060
    %1078 = vmatpush.bf16.msra.mxu0 %v1059
    %1079 = vmatpush.bf16.msra.mxu0 %v1058
    %1080 = vmatpush.bf16.msra.mxu0 %v1057
    %1081 = vmatmul.bf16.gmra.mxu0 %v1004
    %v1082 = vpop.f32.mrf.mxu0
    %v1083 = vadd.f32 %v1023, %v1082
    %v1084 = vpop.f32.mrf.mxu0
    %1085 = vdwg.mxu0
    %v1086 = vtanh.pop %v1083
    %1087 = vst [vmem:[#allocation13] sm:$0xff] %v1086
    // Predicated region
    $region58: #{tpu_custom_call.1} parent=1 // pred_check
      _
    $region59: #{tpu_custom_call.1} parent=1 // pred_check_branch
      %1089 = sbr.rel (0) target = $region61
    $region60: #{tpu_custom_call.1} parent=1 // pred_region
      %1091 = vsyncadd [#allocation4], 0
      %s1093 = sshll.u32 [#allocation13], 4
      %s1094 = int_to_ptr.vmem [resolvable:$true] %s1093
      %s1095 = sshll.u32 %s8, 4
      %s1096 = int_to_ptr.hbm [resolvable:$true] %s1095
      %1098 = dma.vmem_to_hbm [thread:$0]  %s1094, 128, %s1096, [#allocation4]
    $region61: #{tpu_custom_call.1} parent=1 // pred_fallthru
      _
    // Predicated region
    $region62: #{tpu_custom_call.1} parent=1 // pred_check
      _
    $region63: #{tpu_custom_call.1} parent=1 // pred_check_branch
      %1100 = sbr.rel (0) target = $region65
    $region64: #{tpu_custom_call.1} parent=1 // pred_region
      %1102 = dma.done [#allocation4], 128
    $region65: #{tpu_custom_call.1} parent=1 // pred_fallthru
      _
    %1103 = vsyncpa [#allocation3], 1
    %1104 = vsyncpa [#allocation6], 1
    %1105 = vsyncpa [#allocation9], 1
    %1106 = vsyncpa [#allocation12], 1
    %1107 = vsyncpa [#allocation4], 1

</llo_original>
